<compile_context>
chip_gen: v7x
topology: tpu7x:2x2x1
jax: 0.10.0
libtpu: 0.0.40
codegen_flags: <defaults>
</compile_context>

<pallas_src>
import functools

import jax
import jax.numpy as jnp
from jax.experimental import pallas as pl
from jax.experimental.pallas import tpu as pltpu


_INV_SQRT2 = 0.7071067811865476  # 1/sqrt(2), precomputed (VALU mul, not divide)


def _round_up(x: int, m: int) -> int:
    return ((x + m - 1) // m) * m


def _choose_tile(m: int, tm: int) -> int:
    """Pick a row tile: large, 8-aligned, never (much) larger than M, and with
    an even step count when >1 so the parallel axis splits evenly across v7x's
    two TensorCores (irrelevant on single-TC v5e/v6e)."""
    tm_eff = min(tm, _round_up(m, 8))
    n_steps = pl.cdiv(m, tm_eff)
    if n_steps > 1 and n_steps % 2 == 1:
        n_steps += 1
        tm_eff = _round_up(pl.cdiv(m, n_steps), 8)
    return tm_eff


def mlp_kernel(x_ref, w1_ref, b1_ref, w2_ref, b2_ref, o_ref):
    # x_ref:  (tm, D)   row tile of the flattened input, f32 (cast in-kernel)
    # w1_ref: (D, H)    full first-layer weight  (bf16 or f32), VMEM-resident
    # b1_ref: (1, H)    f32
    # w2_ref: (H, D)    full second-layer weight (bf16 or f32), VMEM-resident
    # b2_ref: (1, D)    f32
    # o_ref:  (tm, D)   output tile (f32 by default, optionally bf16)

    # In-kernel cast of the activation tile to the matmul dtype (avoids a
    # separate wrapper-side astype HBM pass).
    x = x_ref[...].astype(w1_ref.dtype)

    # Matmul 1: MXU with f32 accumulation.
    h = jnp.dot(x, w1_ref[...], preferred_element_type=jnp.float32)
    h = h + b1_ref[...]

    # Exact GELU (erf-based), same as torch.nn.GELU() default. Kept in f32.
    h = 0.5 * h * (1.0 + jax.lax.erf(h * jnp.float32(_INV_SQRT2)))

    # Matmul 2: cast the intermediate back to the matmul dtype, f32 accumulate.
    h = h.astype(w2_ref.dtype)
    y = jnp.dot(h, w2_ref[...], preferred_element_type=jnp.float32)
    y = y + b2_ref[...]

    # TODO(synk): Dropout is identity at inference time; training-mode dropout
    # (pltpu.prng_seed / prng_random_bits mask) is intentionally not applied.
    o_ref[...] = y.astype(o_ref.dtype)


@functools.partial(
    jax.jit, static_argnames=("tm", "use_bf16_matmul", "out_bf16"))
def mlp_forward(x, w1, b1, w2, b2, *, tm=2048, use_bf16_matmul=True,
                out_bf16=False):
    """x: [B, S, D] float32.  Returns [B, S, D] (f32 unless out_bf16)."""
    B, S, D = x.shape
    H = w1.shape[1]
    M = B * S

    mm_dtype = jnp.bfloat16 if use_bf16_matmul else jnp.float32

    # Flatten rows only — no pad, no cast: x goes through HBM exactly once,
    # straight into the kernel's input DMA stream.
    x2d = x.reshape(M, D)

    # Weight/bias casts stay in the wrapper (tiny, one-time cost).
    w1c = w1.astype(mm_dtype)
    b1_2d = b1.reshape(1, H).astype(jnp.float32)
    w2c = w2.astype(mm_dtype)
    b2_2d = b2.reshape(1, D).astype(jnp.float32)

    tm_eff = _choose_tile(M, tm)
    grid = (pl.cdiv(M, tm_eff),)  # ragged last block: Pallas masks OOB rows

    out_dtype = jnp.bfloat16 if out_bf16 else x.dtype

    out2d = pl.pallas_call(
        mlp_kernel,
        out_shape=jax.ShapeDtypeStruct((M, D), out_dtype),
        grid_spec=pl.GridSpec(
            grid=grid,
            in_specs=[
                pl.BlockSpec((tm_eff, D), lambda i: (i, 0)),   # x row tile
                pl.BlockSpec((D, H), lambda i: (0, 0)),        # W1 (resident)
                pl.BlockSpec((1, H), lambda i: (0, 0)),        # b1
                pl.BlockSpec((H, D), lambda i: (0, 0)),        # W2 (resident)
                pl.BlockSpec((1, D), lambda i: (0, 0)),        # b2
            ],
            out_specs=pl.BlockSpec((tm_eff, D), lambda i: (i, 0)),
        ),
        compiler_params=pltpu.CompilerParams(
            # Row axis is fully independent -> shardable across v7x's 2 TCs.
            dimension_semantics=("parallel",),
            # Default scoped VMEM is plenty: per-step buffers are ~O(1 MiB)
            # with the natural 32-wide tiles, so no explicit limit needed.
        ),
    )(x2d, w1c, b1_2d, w2c, b2_2d)

    return out2d.reshape(B, S, D)


def reference_mlp(x, w1, b1, w2, b2):
    h = jnp.einsum("bsd,dh->bsh", x, w1) + b1
    h = 0.5 * h * (1.0 + jax.lax.erf(h * _INV_SQRT2))
    return jnp.einsum("bsh,hd->bsd", h, w2) + b2


if __name__ == "__main__":
    # Small shapes consistent with the module:
    #   embedding_dim = 32, feed_forward_expansion = 4 -> hidden = 128
    D, EXP = 32, 4
    H = D * EXP

    key = jax.random.PRNGKey(0)
    kx, kw1, kb1, kw2, kb2, kx2 = jax.random.split(key, 6)

    # Deterministic init mimicking nn.Linear's uniform(-1/sqrt(fan_in), ...)
    w1 = jax.random.uniform(kw1, (D, H), jnp.float32, -1.0 / D**0.5, 1.0 / D**0.5)
    b1 = jax.random.uniform(kb1, (H,), jnp.float32, -1.0 / D**0.5, 1.0 / D**0.5)
    w2 = jax.random.uniform(kw2, (H, D), jnp.float32, -1.0 / H**0.5, 1.0 / H**0.5)
    b2 = jax.random.uniform(kb2, (D,), jnp.float32, -1.0 / H**0.5, 1.0 / H**0.5)

    # Test 1: tiny shape (single grid step, tile auto-shrinks to the row count).
    B, S = 2, 8
    x = jax.random.normal(kx, (B, S, D), dtype=jnp.float32)
    out = mlp_forward(x, w1, b1, w2, b2)
    jax.block_until_ready(out)
    ref = reference_mlp(x, w1, b1, w2, b2)
    assert out.shape == (B, S, D)
    # bf16 matmul operands with f32 accumulation -> ~1e-3..1e-2 deviation.
    assert jnp.allclose(out, ref, atol=2e-2, rtol=2e-2), "mismatch vs reference (small)"

    # Test 2: ragged, multi-tile row count. M = 1200 with tm=512 ->
    # odd 3-step grid gets evened to 4 steps of 304 rows, last block ragged
    # (288 rows) and masked by Pallas — exercises the no-pad path on device.
    B2, S2 = 4, 300
    x2 = jax.random.normal(kx2, (B2, S2, D), dtype=jnp.float32)
    out2 = mlp_forward(x2, w1, b1, w2, b2, tm=512)
    jax.block_until_ready(out2)
    ref2 = reference_mlp(x2, w1, b1, w2, b2)
    assert out2.shape == (B2, S2, D)
    assert jnp.allclose(out2, ref2, atol=2e-2, rtol=2e-2), "mismatch vs reference (tiled)"

    # Test 3: f32 matmul path (bit-closer numerics) on the default large tile.
    out3 = mlp_forward(x2, w1, b1, w2, b2, use_bf16_matmul=False)
    jax.block_until_ready(out3)
    assert jnp.allclose(out3, ref2, atol=1e-5, rtol=1e-5), "mismatch vs reference (f32)"

    print("KERNEL_OK")
</pallas_src>

<mosaic_0001>
module attributes {stable_mosaic.version = 11 : i64} {
  func.func @mlp_kernel(%arg0: i32, %arg1: memref<16x32xf32, #tpu.memory_space<vmem>>, %arg2: memref<32x128xbf16, #tpu.memory_space<vmem>>, %arg3: memref<1x128xf32, #tpu.memory_space<vmem>>, %arg4: memref<128x32xbf16, #tpu.memory_space<vmem>>, %arg5: memref<1x32xf32, #tpu.memory_space<vmem>>, %arg6: memref<16x32xf32, #tpu.memory_space<vmem>>) attributes {dimension_semantics = [#tpu.dimension_semantics<parallel>], iteration_bounds = array<i64: 1>, scalar_prefetch = 0 : i64, scratch_operands = 0 : i64, tpu.core_type = #tpu.core_type<tc>, window_params = [{transform_indices = @transform_0, window_bounds = array<i64: 16, 32>}, {pipeline_mode = #tpu.pipeline_mode<synchronous>, transform_indices = @transform_1, window_bounds = array<i64: 32, 128>}, {pipeline_mode = #tpu.pipeline_mode<synchronous>, transform_indices = @transform_2, window_bounds = array<i64: 1, 128>}, {pipeline_mode = #tpu.pipeline_mode<synchronous>, transform_indices = @transform_3, window_bounds = array<i64: 128, 32>}, {pipeline_mode = #tpu.pipeline_mode<synchronous>, transform_indices = @transform_4, window_bounds = array<i64: 1, 32>}, {transform_indices = @transform_5, window_bounds = array<i64: 16, 32>}]} {
    %c0 = arith.constant 0 : index
    %c0_0 = arith.constant 0 : index
    %0 = vector.load %arg1[%c0, %c0_0] : memref<16x32xf32, #tpu.memory_space<vmem>>, vector<16x32xf32>
    %1 = arith.truncf %0 : vector<16x32xf32> to vector<16x32xbf16>
    %c0_1 = arith.constant 0 : index
    %c0_2 = arith.constant 0 : index
    %2 = vector.load %arg2[%c0_1, %c0_2] : memref<32x128xbf16, #tpu.memory_space<vmem>>, vector<32x128xbf16>
    %cst = arith.constant dense<0.000000e+00> : vector<16x128xf32>
    %3 = tpu.matmul %1, %2, %cst {dimension_numbers = #tpu.dot_dimension_numbers<[1], [0], [0], [1], [0, 0, 1, 1], [], []>} : vector<16x32xbf16>, vector<32x128xbf16>, vector<16x128xf32> -> vector<16x128xf32>
    %c0_3 = arith.constant 0 : index
    %c0_4 = arith.constant 0 : index
    %4 = vector.load %arg3[%c0_3, %c0_4] : memref<1x128xf32, #tpu.memory_space<vmem>>, vector<1x128xf32>
    %5 = vector.broadcast %4 : vector<1x128xf32> to vector<16x128xf32>
    %6 = arith.addf %3, %5 : vector<16x128xf32>
    %cst_5 = arith.constant 5.000000e-01 : f32
    %7 = vector.broadcast %cst_5 : f32 to vector<16x128xf32>
    %8 = arith.mulf %7, %6 : vector<16x128xf32>
    %cst_6 = arith.constant 0.707106769 : f32
    %9 = vector.broadcast %cst_6 : f32 to vector<16x128xf32>
    %10 = arith.mulf %6, %9 : vector<16x128xf32>
    %11 = math.erf %10 : vector<16x128xf32>
    %cst_7 = arith.constant 1.000000e+00 : f32
    %12 = vector.broadcast %cst_7 : f32 to vector<16x128xf32>
    %13 = arith.addf %12, %11 : vector<16x128xf32>
    %14 = arith.mulf %8, %13 : vector<16x128xf32>
    %15 = arith.truncf %14 : vector<16x128xf32> to vector<16x128xbf16>
    %c0_8 = arith.constant 0 : index
    %c0_9 = arith.constant 0 : index
    %16 = vector.load %arg4[%c0_8, %c0_9] : memref<128x32xbf16, #tpu.memory_space<vmem>>, vector<128x32xbf16>
    %cst_10 = arith.constant dense<0.000000e+00> : vector<16x32xf32>
    %17 = tpu.matmul %15, %16, %cst_10 {dimension_numbers = #tpu.dot_dimension_numbers<[1], [0], [0], [1], [0, 0, 1, 1], [], []>} : vector<16x128xbf16>, vector<128x32xbf16>, vector<16x32xf32> -> vector<16x32xf32>
    %c0_11 = arith.constant 0 : index
    %c0_12 = arith.constant 0 : index
    %18 = vector.load %arg5[%c0_11, %c0_12] : memref<1x32xf32, #tpu.memory_space<vmem>>, vector<1x32xf32>
    %19 = vector.broadcast %18 : vector<1x32xf32> to vector<16x32xf32>
    %20 = arith.addf %17, %19 : vector<16x32xf32>
    %c0_13 = arith.constant 0 : index
    %c0_14 = arith.constant 0 : index
    %21 = vector.load %arg6[%c0_13, %c0_14] : memref<16x32xf32, #tpu.memory_space<vmem>>, vector<16x32xf32>
    tpu.vector_store %arg6[%c0_13, %c0_14], %20 {strides = array<i32>} : memref<16x32xf32, #tpu.memory_space<vmem>>, vector<16x32xf32>,
    return
  }
  func.func @transform_0(%arg0: i32) -> (i32, i32) {
    %c0_i32 = arith.constant 0 : i32
    %c0_i32_0 = arith.constant 0 : i32
    return %arg0, %c0_i32 : i32, i32
  }
  func.func @transform_1(%arg0: i32) -> (i32, i32) {
    %c0_i32 = arith.constant 0 : i32
    %c0_i32_0 = arith.constant 0 : i32
    %c0_i32_1 = arith.constant 0 : i32
    return %c0_i32, %c0_i32_0 : i32, i32
  }
  func.func @transform_2(%arg0: i32) -> (i32, i32) {
    %c0_i32 = arith.constant 0 : i32
    %c0_i32_0 = arith.constant 0 : i32
    %c0_i32_1 = arith.constant 0 : i32
    return %c0_i32, %c0_i32_0 : i32, i32
  }
  func.func @transform_3(%arg0: i32) -> (i32, i32) {
    %c0_i32 = arith.constant 0 : i32
    %c0_i32_0 = arith.constant 0 : i32
    %c0_i32_1 = arith.constant 0 : i32
    return %c0_i32, %c0_i32_0 : i32, i32
  }
  func.func @transform_4(%arg0: i32) -> (i32, i32) {
    %c0_i32 = arith.constant 0 : i32
    %c0_i32_0 = arith.constant 0 : i32
    %c0_i32_1 = arith.constant 0 : i32
    return %c0_i32, %c0_i32_0 : i32, i32
  }
  func.func @transform_5(%arg0: i32) -> (i32, i32) {
    %c0_i32 = arith.constant 0 : i32
    %c0_i32_0 = arith.constant 0 : i32
    return %arg0, %c0_i32 : i32, i32
  }
}

</mosaic_0001>

<llo_original>
// kernel: mlp_forward.1
$region0: #{mlp_forward.1}
  #allocation0 [shape = 'u32[]', space=smem, size = 0x4, offset = 0x4, fixed_abs, tag = 'smem constant byte address 0x4 - core index']
  #allocation1 [shape = 'u32[144,128]{1,0:T(1,128)}', space=vmem, size = 0x12000, scoped, tag = 'internal scratch']
  %s0 = inlined_call_operand.vmem [shape: f32[16,32], index: 0, kind: input, shape index: {}]
  %s1 = inlined_call_operand.vmem [shape: bf16[32,128], index: 1, kind: input, shape index: {}]
  %s2 = inlined_call_operand.vmem [shape: f32[1,128], index: 2, kind: input, shape index: {}]
  %s3 = inlined_call_operand.vmem [shape: bf16[128,32], index: 3, kind: input, shape index: {}]
  %s4 = inlined_call_operand.vmem [shape: f32[1,32], index: 4, kind: input, shape index: {}]
  %s5 = inlined_call_operand.hbm [shape: f32[16,32], index: 5, kind: output, shape index: {}]
  %s6 = sld [smem:[#allocation0]]
  $region30: #{mlp_forward.1} parent=0
    _
  %s8 = ssub.s32 1, %s6
  %s9 = scalar_select 0, %s8, %s6
  $region1: #{mlp_forward.1} parent=0
    #allocation2 [shape = 'u8[8192]{0}', space=vmem, size = 0x2000, scoped, tag = 'output window, operand 0, single buffered']
    #allocation3 [shape = 's32[1]{0}', space=sflag, size = 0x4, scoped, tag = 'scoped memory for mlp_forward.1']
    %10 = vsyncpa [#allocation3], 0
    // Predicated region
    $region2: #{mlp_forward.1} parent=1 // pred_check
      _
    $region3: #{mlp_forward.1} parent=1 // pred_check_branch
      %12 = sbr.rel (0) target = $region5
    $region4: #{mlp_forward.1} parent=1 // pred_region
      _
    $region5: #{mlp_forward.1} parent=1 // pred_fallthru
      _
    // Predicated region
    $region6: #{mlp_forward.1} parent=1 // pred_check
      _
    $region7: #{mlp_forward.1} parent=1 // pred_check_branch
      %14 = sbr.rel (0) target = $region9
    $region8: #{mlp_forward.1} parent=1 // pred_region
      _
    $region9: #{mlp_forward.1} parent=1 // pred_fallthru
      _
    // Predicated region
    $region10: #{mlp_forward.1} parent=1 // pred_check
      _
    $region11: #{mlp_forward.1} parent=1 // pred_check_branch
      %16 = sbr.rel (0) target = $region13
    $region12: #{mlp_forward.1} parent=1 // pred_region
      _
    $region13: #{mlp_forward.1} parent=1 // pred_fallthru
      _
    // Predicated region
    $region14: #{mlp_forward.1} parent=1 // pred_check
      _
    $region15: #{mlp_forward.1} parent=1 // pred_check_branch
      %18 = sbr.rel (0) target = $region17
    $region16: #{mlp_forward.1} parent=1 // pred_region
      _
    $region17: #{mlp_forward.1} parent=1 // pred_fallthru
      _
    // Predicated region
    $region18: #{mlp_forward.1} parent=1 // pred_check
      _
    $region19: #{mlp_forward.1} parent=1 // pred_check_branch
      %20 = sbr.rel (0) target = $region21
    $region20: #{mlp_forward.1} parent=1 // pred_region
      _
    $region21: #{mlp_forward.1} parent=1 // pred_fallthru
      _
    %v22 = vld [vmem:[%s0] sm:$0xff]
    %v23 = vld [vmem:[%s0 + $0x8] sm:$0xff]
    %v24 = vpack.c.bf16 %v23, %v22
    %v25 = vld [vmem:[%s1] sm:$0xf]
    %v26 = vld [vmem:[%s1 + $0x4] sm:$0xf]
    %v27 = vld [vmem:[%s1 + $0x8] sm:$0xf]
    %v28 = vld [vmem:[%s1 + $0xc] sm:$0xf]
    %v29 = vld [vmem:[%s2] sm:$0x1]
    %v31 = vlaneseq
    %v32 = vshrl.u32 %v31, 7
    %v33 = vsub.s32 0, %v32
    %v34 = vrot.slane %v29, %v33
    %v40 = vunpack.c.l.b16 %v25
    %v41 = vunpack.c.l.b16 %v26
    %v42 = vunpack.c.l.b16 %v27
    %v43 = vunpack.c.l.b16 %v28
    %v44 = vpack.c.b16 %v41, %v40
    %v45 = vpack.c.b16 %v43, %v42
    %vm48 = vcmask 261120
    %v50 = vsel %vm48, %v24, 0
    %52 = vmatprep.subr.bf16.mxu0 0
    %53 = vmatpush1.bf16.msra.mxu0 %v44
    %54 = vmatprep.subr.bf16.mxu0 0
    %55 = vmatpush1.bf16.msra.mxu0 %v45
    %56 = vmatprep.subr.bf16.mxu0 0
    %57 = vmatpush1.bf16.msra.mxu0 0
    %58 = vmatprep.subr.bf16.mxu0 0
    %59 = vmatpush1.bf16.msra.mxu0 0
    %60 = vmatprep.subr.bf16.mxu0 0
    %61 = vmatpush1.bf16.msra.mxu0 0
    %62 = vmatprep.subr.bf16.mxu0 0
    %63 = vmatpush1.bf16.msra.mxu0 0
    %64 = vmatprep.subr.bf16.mxu0 0
    %65 = vmatpush1.bf16.msra.mxu0 0
    %66 = vmatprep.subr.bf16.mxu0 0
    %67 = vmatpush1.bf16.msra.mxu0 0
    %68 = vmatprep.subr.bf16.mxu0 0
    %69 = vmatpush1.bf16.msra.mxu0 0
    %70 = vmatprep.subr.bf16.mxu0 0
    %71 = vmatpush1.bf16.msra.mxu0 0
    %72 = vmatprep.subr.bf16.mxu0 0
    %73 = vmatpush1.bf16.msra.mxu0 0
    %74 = vmatprep.subr.bf16.mxu0 0
    %75 = vmatpush1.bf16.msra.mxu0 0
    %76 = vmatprep.subr.bf16.mxu0 0
    %77 = vmatpush1.bf16.msra.mxu0 0
    %78 = vmatprep.subr.bf16.mxu0 0
    %79 = vmatpush1.bf16.msra.mxu0 0
    %80 = vmatprep.subr.bf16.mxu0 0
    %81 = vmatpush1.bf16.msra.mxu0 0
    %82 = vmatprep.subr.bf16.mxu0 0
    %83 = vmatpush1.bf16.msra.mxu0 0
    %84 = vmatprep.mubr.bf16.mxu0 0
    %85 = vmatmul.mubr.bf16.gmra.mrb[0].mxu0 %v50
    %v86 = vpop.f32.mrb[0].mxu0
    %v87 = vadd.f32 %v34, %v86
    %v88 = vpop.f32.mrb[0].mxu0
    %v89 = vpop.f32.mrb[0].mxu0
    %v90 = vadd.f32 %v34, %v89
    %v91 = vpop.f32.mrb[0].mxu0
    %92 = vdwg.mxu0
    %v93 = vmul.f32 %v87, 0.5
    %v94 = vmul.f32 %v90, 0.5
    %v95 = vmul.f32 %v87, 0.70710677
    %v96 = vmul.f32 %v90, 0.70710677
    %v97 = verf.f32.pop %v95
    %v98 = verf.f32.pop %v96
    %v99 = vadd.f32 %v97, 1.0
    %v100 = vadd.f32 %v98, 1.0
    %v101 = vmul.f32 %v93, %v99
    %v102 = vmul.f32 %v94, %v100
    %v103 = vpack.c.bf16 %v102, %v101
    %v104 = vld [vmem:[%s3] sm:$0xf]
    %v105 = vld [vmem:[%s3 + $0x4] sm:$0xf]
    %v106 = vld [vmem:[%s3 + $0x8] sm:$0xf]
    %v107 = vld [vmem:[%s3 + $0xc] sm:$0xf]
    %v108 = vld [vmem:[%s3 + $0x10] sm:$0xf]
    %v109 = vld [vmem:[%s3 + $0x14] sm:$0xf]
    %v110 = vld [vmem:[%s3 + $0x18] sm:$0xf]
    %v111 = vld [vmem:[%s3 + $0x1c] sm:$0xf]
    %v112 = vld [vmem:[%s3 + $0x20] sm:$0xf]
    %v113 = vld [vmem:[%s3 + $0x24] sm:$0xf]
    %v114 = vld [vmem:[%s3 + $0x28] sm:$0xf]
    %v115 = vld [vmem:[%s3 + $0x2c] sm:$0xf]
    %v116 = vld [vmem:[%s3 + $0x30] sm:$0xf]
    %v117 = vld [vmem:[%s3 + $0x34] sm:$0xf]
    %v118 = vld [vmem:[%s3 + $0x38] sm:$0xf]
    %v119 = vld [vmem:[%s3 + $0x3c] sm:$0xf]
    %v120 = vld [vmem:[%s4] sm:$0x1]
    %v122 = vlaneseq
    %v123 = vshrl.u32 %v122, 7
    %v124 = vsub.s32 0, %v123
    %v125 = vrot.slane %v120, %v124
    %v143 = vunpack.c.l.b16 %v104
    %v144 = vunpack.c.l.b16 %v105
    %v145 = vunpack.c.l.b16 %v106
    %v146 = vunpack.c.l.b16 %v107
    %v147 = vunpack.c.l.b16 %v108
    %v148 = vunpack.c.l.b16 %v109
    %v149 = vunpack.c.l.b16 %v110
    %v150 = vunpack.c.l.b16 %v111
    %v151 = vunpack.c.l.b16 %v112
    %v152 = vunpack.c.l.b16 %v113
    %v153 = vunpack.c.l.b16 %v114
    %v154 = vunpack.c.l.b16 %v115
    %v155 = vunpack.c.l.b16 %v116
    %v156 = vunpack.c.l.b16 %v117
    %v157 = vunpack.c.l.b16 %v118
    %v158 = vunpack.c.l.b16 %v119
    %v159 = vpack.c.b16 %v144, %v143
    %v160 = vpack.c.b16 %v146, %v145
    %v161 = vpack.c.b16 %v148, %v147
    %v162 = vpack.c.b16 %v150, %v149
    %v163 = vpack.c.b16 %v152, %v151
    %v164 = vpack.c.b16 %v154, %v153
    %v165 = vpack.c.b16 %v156, %v155
    %v166 = vpack.c.b16 %v158, %v157
    %175 = vmatprep.subr.bf16.mxu0 0
    %176 = vmatpush1.bf16.msra.mxu0 %v159
    %177 = vmatprep.subr.bf16.mxu0 0
    %178 = vmatpush1.bf16.msra.mxu0 %v160
    %179 = vmatprep.subr.bf16.mxu0 0
    %180 = vmatpush1.bf16.msra.mxu0 %v161
    %181 = vmatprep.subr.bf16.mxu0 0
    %182 = vmatpush1.bf16.msra.mxu0 %v162
    %183 = vmatprep.subr.bf16.mxu0 0
    %184 = vmatpush1.bf16.msra.mxu0 %v163
    %185 = vmatprep.subr.bf16.mxu0 0
    %186 = vmatpush1.bf16.msra.mxu0 %v164
    %187 = vmatprep.subr.bf16.mxu0 0
    %188 = vmatpush1.bf16.msra.mxu0 %v165
    %189 = vmatprep.subr.bf16.mxu0 0
    %190 = vmatpush1.bf16.msra.mxu0 %v166
    %191 = vmatprep.subr.bf16.mxu0 0
    %192 = vmatpush1.bf16.msra.mxu0 0
    %193 = vmatprep.subr.bf16.mxu0 0
    %194 = vmatpush1.bf16.msra.mxu0 0
    %195 = vmatprep.subr.bf16.mxu0 0
    %196 = vmatpush1.bf16.msra.mxu0 0
    %197 = vmatprep.subr.bf16.mxu0 0
    %198 = vmatpush1.bf16.msra.mxu0 0
    %199 = vmatprep.subr.bf16.mxu0 0
    %200 = vmatpush1.bf16.msra.mxu0 0
    %201 = vmatprep.subr.bf16.mxu0 0
    %202 = vmatpush1.bf16.msra.mxu0 0
    %203 = vmatprep.subr.bf16.mxu0 0
    %204 = vmatpush1.bf16.msra.mxu0 0
    %205 = vmatprep.subr.bf16.mxu0 0
    %206 = vmatpush1.bf16.msra.mxu0 0
    %207 = vmatprep.mubr.bf16.mxu0 0
    %208 = vmatmul.mubr.bf16.gmra.mrb[0].mxu0 %v103
    %v209 = vpop.f32.mrb[0].mxu0
    %v210 = vadd.f32 %v125, %v209
    %v211 = vpop.f32.mrb[0].mxu0
    %v212 = vpop.f32.mrb[0].mxu0
    %v213 = vadd.f32 %v125, %v212
    %v214 = vpop.f32.mrb[0].mxu0
    %215 = vdwg.mxu0
    %216 = vst.msk [vmem:[#allocation2] sm:$0xff] %vm48, %v210
    %217 = vst.msk [vmem:[#allocation2 + $0x8] sm:$0xff] %vm48, %v213
    // Predicated region
    $region22: #{mlp_forward.1} parent=1 // pred_check
      _
    $region23: #{mlp_forward.1} parent=1 // pred_check_branch
      %219 = sbr.rel (0) target = $region25
    $region24: #{mlp_forward.1} parent=1 // pred_region
      %s221 = ssub.s32 256, 256
      %222 = vsyncadd [#allocation3], %s221
      %s223 = sshll.u32 [#allocation2], 4
      %s224 = int_to_ptr.vmem [resolvable:$true] %s223
      %229 = dma.vmem_to_hbm [thread:$0]  %s224, 256, %s5, [#allocation3], 128, 128, 8
    $region25: #{mlp_forward.1} parent=1 // pred_fallthru
      _
    // Predicated region
    $region26: #{mlp_forward.1} parent=1 // pred_check
      _
    $region27: #{mlp_forward.1} parent=1 // pred_check_branch
      %231 = sbr.rel (0) target = $region29
    $region28: #{mlp_forward.1} parent=1 // pred_region
      %232 = dma.done [#allocation3], 256
    $region29: #{mlp_forward.1} parent=1 // pred_fallthru
      _
    %233 = vsyncpa [#allocation3], 1

</llo_original>
